<compile_context>
chip_gen: v6e
topology: v6e:2x2x1
jax: 0.10.0
libtpu: 0.0.40
codegen_flags: <defaults>
</compile_context>

<pallas_src>
import functools
import math

import jax
import jax.numpy as jnp
from jax.experimental import pallas as pl
from jax.experimental.pallas import tpu as pltpu


def _int_pow(b, n):
    """b**n for a static non-negative integer n via repeated multiplication (VPU only)."""
    assert n >= 0
    if n == 0:
        return jnp.ones_like(b)
    result = None
    while n > 0:
        if n & 1:
            result = b if result is None else result * b
        n >>= 1
        if n:
            b = b * b
    return result


def _focal_loss_kernel(x_ref, y_ref, out_ref, *, gamma_neg, gamma_pos, eps, n_cls):
    x = x_ref[...].astype(jnp.float32)      # [BM, C] logits
    y = y_ref[...].astype(jnp.float32)      # [BM, C] binarized targets

    log_eps = math.log(eps)

    # Numerically stable fused log-sigmoid path (1 exp + 1 log per element):
    #   t = exp(-|x|)
    #   log(sigmoid(x))  =  min(x, 0) - log(1 + t)
    #   log(sigmoid(-x)) = -max(x, 0) - log(1 + t)
    t = jnp.exp(-jnp.abs(x))
    log1p_t = jnp.log(1.0 + t)
    # torch: log(p.clamp(min=eps)) == max(log(p), log(eps))  (log is monotone)
    log_pos = jnp.maximum(jnp.minimum(x, 0.0) - log1p_t, log_eps)
    log_neg = jnp.maximum(-jnp.maximum(x, 0.0) - log1p_t, log_eps)

    # y is binarized, so  y*log_pos + (1-y)*log_neg == log_neg + y*(log_pos - log_neg)
    loss = log_neg + y * (log_pos - log_neg)

    if gamma_neg > 0 or gamma_pos > 0:
        inv = 1.0 / (1.0 + t)
        xs_pos = jnp.where(x >= 0.0, inv, t * inv)   # sigmoid(x), overflow-safe
        xs_neg = 1.0 - xs_pos
        if float(gamma_pos).is_integer() and float(gamma_neg).is_integer():
            # Focal base is xs_neg on positives, xs_pos on negatives; integer
            # gammas become repeated multiplies (also sidesteps pow(0,0)=NaN).
            w = jnp.where(
                y > 0.5,
                _int_pow(xs_neg, int(gamma_pos)),
                _int_pow(xs_pos, int(gamma_neg)),
            )
        else:
            # General (non-integer gamma) fallback mirrors torch.pow exactly.
            anti = 1.0 - y
            base = 1.0 - xs_pos * y - xs_neg * anti
            expo = gamma_pos * y + gamma_neg * anti
            w = jnp.power(base, expo)
        loss = loss * w

    # Per-row (class-axis) reductions: 3 cross-lane (XLU) reductions instead of 4;
    # the negative-class sums are derived algebraically.
    pos_cnt = jnp.sum(y, axis=1, keepdims=True)          # [BM, 1]
    pos_num = jnp.sum(y * loss, axis=1, keepdims=True)   # [BM, 1]
    total = jnp.sum(loss, axis=1, keepdims=True)         # [BM, 1]
    neg_num = total - pos_num                            # == sum((1-y) * loss)
    neg_cnt = n_cls - pos_cnt                            # == sum(1-y)

    per_sample = pos_num / (pos_cnt + eps) + neg_num / (neg_cnt + eps)
    out_ref[...] = per_sample.astype(out_ref.dtype)


def _round_up(v, m):
    return -(-v // m) * m


def _sublane_multiple(dtype):
    # min sublane tile per element width (f32:8, bf16:16, int8/fp8:32)
    return {1: 32, 2: 16, 4: 8}.get(jnp.dtype(dtype).itemsize, 8)


def _vmem_capacity_bytes():
    try:
        return int(pltpu.get_tpu_info().vmem_capacity_bytes)
    except Exception:
        return 64 * 1024 * 1024   # conservative: v7x per-TensorCore VMEM


def focal_loss_scaled(x, y, *, gamma_neg=4, gamma_pos=1, eps=1e-8, reduce="mean"):
    """Pallas implementation of FocalLossScaled.forward.

    x: [B, C] logits, y: [B, C] multi-label binarized targets (0/1).
    Narrower input dtypes (bf16 x, bf16/int8 y) are accepted and cast to f32
    in-kernel, which roughly halves HBM traffic on bandwidth-bound chips.
    """
    B, C = x.shape
    assert y.shape == (B, C)

    sub_m = max(_sublane_multiple(x.dtype), _sublane_multiple(y.dtype))
    item_bytes = jnp.dtype(x.dtype).itemsize + jnp.dtype(y.dtype).itemsize

    # --- pick the batch tile from a VMEM budget (double-buffered x + y) ---
    vmem_cap = _vmem_capacity_bytes()
    input_budget = int(vmem_cap * 0.40)
    bytes_per_row_dbuf = 2 * C * item_bytes
    max_rows = max(sub_m, (input_budget // bytes_per_row_dbuf) // sub_m * sub_m)
    max_rows = min(max_rows, 1024)          # measured per-step sweet spot

    b_rounded = _round_up(B, sub_m)
    if b_rounded <= max_rows:
        if b_rounded >= 2 * sub_m:
            # keep >= 2 grid steps so the parallel axis can use both v7x cores
            block_b = _round_up(-(-b_rounded // 2), sub_m)
        else:
            block_b = b_rounded
    else:
        block_b = max_rows

    num_blocks = pl.cdiv(B, block_b)

    # TODO(synk): for extremely large class counts (C so large that even 8 rows
    # overflow the VMEM budget) a second ("arbitrary") grid axis over C with
    # per-row accumulator scratch would be needed; typical class counts only
    # shrink block_b via the budget above, which stays correct and efficient.

    kernel = functools.partial(
        _focal_loss_kernel,
        gamma_neg=float(gamma_neg),
        gamma_pos=float(gamma_pos),
        eps=float(eps),
        n_cls=float(C),
    )

    tile_bytes = 2 * block_b * C * item_bytes      # double-buffered inputs
    vmem_limit = int(min(vmem_cap * 0.85,
                         max(tile_bytes * 1.5 + (2 << 20), 32 * 1024 * 1024)))

    cost = pl.CostEstimate(
        flops=20 * B * C,
        transcendentals=3 * B * C,
        bytes_accessed=int(B * C * item_bytes + B * 4),
    )

    # No wrapper-side padding: a ragged final batch block is handled by Pallas
    # edge clipping (OOB input rows are unused; their outputs fall outside the
    # (B, 1) result and are dropped on writeback).
    per_sample = pl.pallas_call(
        kernel,
        out_shape=jax.ShapeDtypeStruct((B, 1), jnp.float32),
        grid_spec=pltpu.PrefetchScalarGridSpec(
            num_scalar_prefetch=0,
            grid=(num_blocks,),
            in_specs=[
                pl.BlockSpec((block_b, C), lambda i: (i, 0)),
                pl.BlockSpec((block_b, C), lambda i: (i, 0)),
            ],
            out_specs=pl.BlockSpec((block_b, 1), lambda i: (i, 0)),
        ),
        compiler_params=pltpu.CompilerParams(
            dimension_semantics=("parallel",),
            vmem_limit_bytes=vmem_limit,
        ),
        cost_estimate=cost,
    )(x, y)

    per_sample = per_sample[:, 0]
    neg_per_sample = -per_sample

    # torch: self.op(-self.loss[~self.loss.isnan()])  (NaN-filtered reduction)
    valid = ~jnp.isnan(per_sample)
    if reduce == "mean":
        num = jnp.sum(jnp.where(valid, neg_per_sample, 0.0))
        den = jnp.sum(valid.astype(jnp.float32))
        return num / den
    elif reduce == "sum":
        return jnp.sum(jnp.where(valid, neg_per_sample, 0.0))
    elif reduce == "none":
        # TODO(synk): torch boolean-mask indexing yields a dynamically-sized
        # tensor; we return the full per-sample vector with NaNs zeroed.
        return jnp.where(valid, neg_per_sample, 0.0)
    else:
        raise NotImplementedError


def _reference_jax(x, y, gamma_neg=4, gamma_pos=1, eps=1e-8):
    """Pure-JAX reference mirroring the torch code exactly."""
    x = x.astype(jnp.float32)
    y = y.astype(jnp.float32)
    anti = 1.0 - y
    xs_pos = jax.nn.sigmoid(x)
    xs_neg = 1.0 - xs_pos
    loss = y * jnp.log(jnp.maximum(xs_pos, eps)) + anti * jnp.log(jnp.maximum(xs_neg, eps))
    if gamma_neg > 0 or gamma_pos > 0:
        xp = xs_pos * y
        xn = xs_neg * anti
        w = jnp.power(1.0 - xp - xn, gamma_pos * y + gamma_neg * anti)
        loss = loss * w
    pos = jnp.sum(y * loss, axis=1) / (jnp.sum(y, axis=1) + eps)
    neg = jnp.sum(anti * loss, axis=1) / (jnp.sum(anti, axis=1) + eps)
    per = pos + neg
    valid = ~jnp.isnan(per)
    return jnp.sum(jnp.where(valid, -per, 0.0)) / jnp.sum(valid.astype(jnp.float32))


if __name__ == "__main__":
    key = jax.random.PRNGKey(0)
    kx, ky = jax.random.split(key)

    B, C = 32, 256
    x = jax.random.normal(kx, (B, C), dtype=jnp.float32) * 3.0
    y = (jax.random.uniform(ky, (B, C)) < 0.1).astype(jnp.float32)

    out = jax.block_until_ready(
        focal_loss_scaled(x, y, gamma_neg=4, gamma_pos=1, eps=1e-8, reduce="mean"))
    ref = _reference_jax(x, y)

    assert jnp.isfinite(out), out
    assert jnp.allclose(out, ref, rtol=1e-4, atol=1e-4), (out, ref)

    print("KERNEL_OK")
</pallas_src>

<mosaic_0001>
module attributes {stable_mosaic.version = 11 : i64} {
  func.func @_focal_loss_kernel(%arg0: i32, %arg1: memref<16x256xf32, #tpu.memory_space<vmem>>, %arg2: memref<16x256xf32, #tpu.memory_space<vmem>>, %arg3: memref<16x1xf32, #tpu.memory_space<vmem>>) attributes {dimension_semantics = [#tpu.dimension_semantics<parallel>], iteration_bounds = array<i64: 2>, scalar_prefetch = 0 : i64, scratch_operands = 0 : i64, tpu.core_type = #tpu.core_type<tc>, window_params = [{transform_indices = @transform_0, window_bounds = array<i64: 16, 256>}, {transform_indices = @transform_1, window_bounds = array<i64: 16, 256>}, {transform_indices = @transform_2, window_bounds = array<i64: 16, 1>}]} {
    %c0 = arith.constant 0 : index
    %c0_0 = arith.constant 0 : index
    %0 = vector.load %arg1[%c0, %c0_0] : memref<16x256xf32, #tpu.memory_space<vmem>>, vector<16x256xf32>
    %c0_1 = arith.constant 0 : index
    %c0_2 = arith.constant 0 : index
    %1 = vector.load %arg2[%c0_1, %c0_2] : memref<16x256xf32, #tpu.memory_space<vmem>>, vector<16x256xf32>
    %2 = math.absf %0 : vector<16x256xf32>
    %cst = arith.constant 0.000000e+00 : f32
    %3 = vector.broadcast %cst : f32 to vector<16x256xf32>
    %4 = arith.subf %3, %2 : vector<16x256xf32>
    %5 = math.exp %4 : vector<16x256xf32>
    %cst_3 = arith.constant 1.000000e+00 : f32
    %6 = vector.broadcast %cst_3 : f32 to vector<16x256xf32>
    %7 = arith.addf %6, %5 : vector<16x256xf32>
    %8 = math.log %7 : vector<16x256xf32>
    %cst_4 = arith.constant 0.000000e+00 : f32
    %9 = vector.broadcast %cst_4 : f32 to vector<16x256xf32>
    %10 = arith.minimumf %0, %9 : vector<16x256xf32>
    %11 = arith.subf %10, %8 : vector<16x256xf32>
    %cst_5 = arith.constant -18.420681 : f32
    %12 = vector.broadcast %cst_5 : f32 to vector<16x256xf32>
    %13 = arith.maximumf %11, %12 : vector<16x256xf32>
    %cst_6 = arith.constant 0.000000e+00 : f32
    %14 = vector.broadcast %cst_6 : f32 to vector<16x256xf32>
    %15 = arith.maximumf %0, %14 : vector<16x256xf32>
    %cst_7 = arith.constant 0.000000e+00 : f32
    %16 = vector.broadcast %cst_7 : f32 to vector<16x256xf32>
    %17 = arith.subf %16, %15 : vector<16x256xf32>
    %18 = arith.subf %17, %8 : vector<16x256xf32>
    %cst_8 = arith.constant -18.420681 : f32
    %19 = vector.broadcast %cst_8 : f32 to vector<16x256xf32>
    %20 = arith.maximumf %18, %19 : vector<16x256xf32>
    %21 = arith.subf %13, %20 : vector<16x256xf32>
    %22 = arith.mulf %1, %21 : vector<16x256xf32>
    %23 = arith.addf %20, %22 : vector<16x256xf32>
    %cst_9 = arith.constant 1.000000e+00 : f32
    %24 = vector.broadcast %cst_9 : f32 to vector<16x256xf32>
    %25 = arith.addf %24, %5 : vector<16x256xf32>
    %cst_10 = arith.constant 1.000000e+00 : f32
    %26 = vector.broadcast %cst_10 : f32 to vector<16x256xf32>
    %27 = arith.divf %26, %25 : vector<16x256xf32>
    %cst_11 = arith.constant 0.000000e+00 : f32
    %28 = vector.broadcast %cst_11 : f32 to vector<16x256xf32>
    %29 = arith.cmpf oge, %0, %28 : vector<16x256xf32>
    %30 = arith.mulf %5, %27 : vector<16x256xf32>
    %31 = arith.select %29, %27, %30 : vector<16x256xi1>, vector<16x256xf32>
    %cst_12 = arith.constant 1.000000e+00 : f32
    %32 = vector.broadcast %cst_12 : f32 to vector<16x256xf32>
    %33 = arith.subf %32, %31 : vector<16x256xf32>
    %cst_13 = arith.constant 5.000000e-01 : f32
    %34 = vector.broadcast %cst_13 : f32 to vector<16x256xf32>
    %35 = arith.cmpf ogt, %1, %34 : vector<16x256xf32>
    %36 = arith.mulf %31, %31 : vector<16x256xf32>
    %37 = arith.mulf %36, %36 : vector<16x256xf32>
    %38 = arith.select %35, %33, %37 : vector<16x256xi1>, vector<16x256xf32>
    %39 = arith.mulf %23, %38 : vector<16x256xf32>
    %cst_14 = arith.constant dense<0.000000e+00> : vector<16xf32>
    %40 = vector.multi_reduction <add>, %1, %cst_14 [1] : vector<16x256xf32> to vector<16xf32>
    %41 = vector.shape_cast %40 : vector<16xf32> to vector<16x1xf32>
    %42 = arith.mulf %1, %39 : vector<16x256xf32>
    %cst_15 = arith.constant dense<0.000000e+00> : vector<16xf32>
    %43 = vector.multi_reduction <add>, %42, %cst_15 [1] : vector<16x256xf32> to vector<16xf32>
    %44 = vector.shape_cast %43 : vector<16xf32> to vector<16x1xf32>
    %cst_16 = arith.constant dense<0.000000e+00> : vector<16xf32>
    %45 = vector.multi_reduction <add>, %39, %cst_16 [1] : vector<16x256xf32> to vector<16xf32>
    %46 = vector.shape_cast %45 : vector<16xf32> to vector<16x1xf32>
    %47 = arith.subf %46, %44 : vector<16x1xf32>
    %cst_17 = arith.constant 2.560000e+02 : f32
    %48 = vector.broadcast %cst_17 : f32 to vector<16x1xf32>
    %49 = arith.subf %48, %41 : vector<16x1xf32>
    %cst_18 = arith.constant 9.99999993E-9 : f32
    %50 = vector.broadcast %cst_18 : f32 to vector<16x1xf32>
    %51 = arith.addf %41, %50 : vector<16x1xf32>
    %52 = arith.divf %44, %51 : vector<16x1xf32>
    %cst_19 = arith.constant 9.99999993E-9 : f32
    %53 = vector.broadcast %cst_19 : f32 to vector<16x1xf32>
    %54 = arith.addf %49, %53 : vector<16x1xf32>
    %55 = arith.divf %47, %54 : vector<16x1xf32>
    %56 = arith.addf %52, %55 : vector<16x1xf32>
    %c0_20 = arith.constant 0 : index
    %c0_21 = arith.constant 0 : index
    %57 = vector.load %arg3[%c0_20, %c0_21] : memref<16x1xf32, #tpu.memory_space<vmem>>, vector<16x1xf32>
    tpu.vector_store %arg3[%c0_20, %c0_21], %56 {strides = array<i32>} : memref<16x1xf32, #tpu.memory_space<vmem>>, vector<16x1xf32>,
    return
  }
  func.func @transform_0(%arg0: i32) -> (i32, i32) {
    %c0_i32 = arith.constant 0 : i32
    %c0_i32_0 = arith.constant 0 : i32
    return %arg0, %c0_i32 : i32, i32
  }
  func.func @transform_1(%arg0: i32) -> (i32, i32) {
    %c0_i32 = arith.constant 0 : i32
    %c0_i32_0 = arith.constant 0 : i32
    return %arg0, %c0_i32 : i32, i32
  }
  func.func @transform_2(%arg0: i32) -> (i32, i32) {
    %c0_i32 = arith.constant 0 : i32
    %c0_i32_0 = arith.constant 0 : i32
    return %arg0, %c0_i32 : i32, i32
  }
}

</mosaic_0001>

<llo_original>
// kernel: tpu_custom_call.1
$region0: #{tpu_custom_call.1}
  #allocation0 [shape = 'u32[]', space=smem, size = 0x4, offset = 0x4, fixed_abs, tag = 'smem constant byte address 0x4 - core index']
  #allocation1 [shape = 'u32[144,128]{1,0:T(1,128)}', space=vmem, size = 0x12000, scoped, tag = 'internal scratch']
  %s0 = inlined_call_operand.hbm [shape: f32[32,256], index: 0, kind: input, shape index: {}]
  %s1 = inlined_call_operand.hbm [shape: f32[32,256], index: 1, kind: input, shape index: {}]
  %s2 = inlined_call_operand.vmem [shape: f32[32,1], index: 2, kind: output, shape index: {}]
  %s3 = sld [smem:[#allocation0]]
  $region49: #{tpu_custom_call.1} parent=0
    _
  %s5 = ssub.s32 1, %s3
  %s6 = scalar_select 0, %s5, %s3
  $region1: #{tpu_custom_call.1} parent=0
    #allocation2 [shape = 'u8[32768]{0}', space=vmem, size = 0x8000, scoped, tag = 'input window, operand 0']
    #allocation3 [shape = 's32[2]{0}', space=sflag, size = 0x8, scoped, tag = 'scoped memory for tpu_custom_call.1']
    #allocation4 [shape = 'u8[32768]{0}', space=vmem, size = 0x8000, scoped, tag = 'input window, operand 1']
    #allocation5 [shape = 's32[2]{0}', space=sflag, size = 0x8, scoped, tag = 'scoped memory for tpu_custom_call.1']
    %7 = vsyncpa [#allocation3], 0
    %s8 = scalar_lea.sflag [#allocation3], 1
    %9 = vsyncpa %s8, 0
    %10 = vsyncpa [#allocation5], 0
    %s11 = scalar_lea.sflag [#allocation5], 1
    %12 = vsyncpa %s11, 0
    loop: start=0, step=1, limit=4
    $region2: #{tpu_custom_call.1} parent=1 // loop_pre_header
      _
    $region3: #{tpu_custom_call.1} parent=1 // loop_header
      %s14 = sphi 0, %s18
      %p15 = scmp.ge.s32.totalorder %s14, 4
      %s24 = sphi 0, %s26
      %s27 = sphi 0, %s24
      %s28 = sphi 0, %s27
      %s44 = sphi 0, %s28
      %s50 = sphi 0, %s52
      %s53 = sphi 0, %s50
      %s54 = sphi 0, %s53
      %s70 = sphi 0, %s54
      %s76 = sphi 0, %s78
      %s79 = sphi 0, %s76
      %s80 = sphi 0, %s79
      %s96 = sphi 0, %s80
    $region4: #{tpu_custom_call.1} parent=1 // loop_header_branch
      %17 = sbr.rel (%p15) target = $region8
    $region5: #{tpu_custom_call.1} parent=1 // loop_body
      %s19 = ssub.s32 %s14, 1
      %s20 = ssub.s32 %s14, 2
      %s21 = sadd.s32 %s14, 1
      %s22 = ssub.s32 %s14, %s21
      %p23 = scmp.eq.s32.totalorder %s22, 0
      %s25 = sadd.s32 %s24, 1
      %s26 = scalar_select %p23, %s24, %s25
      %p29 = pneg %p23
      %p30 = scmp.eq.s32.totalorder %s14, 1
      %p31 = por %p29, %p30
      %p32 = scmp.ne.s32.totalorder %s24, %s27
      %p33 = scmp.eq.s32.totalorder %s14, 0
      %p34 = por %p32, %p33
      %p35 = scmp.ne.s32.totalorder %s24, %s27
      %p36 = scmp.eq.s32.totalorder %s19, 1
      %p37 = por %p35, %p36
      %p38 = scmp.ne.s32.totalorder %s27, %s28
      %p39 = scmp.eq.s32.totalorder %s19, 0
      %p40 = por %p38, %p39
      %p41 = scmp.ne.s32.totalorder %s27, %s28
      %p42 = scmp.eq.s32.totalorder %s20, 1
      %p43 = por %p41, %p42
      %p45 = scmp.ne.s32.totalorder %s28, %s44
      %p46 = scmp.eq.s32.totalorder %s20, 0
      %p47 = por %p45, %p46
      %s48 = ssub.s32 %s14, %s21
      %p49 = scmp.eq.s32.totalorder %s48, 0
      %s51 = sadd.s32 %s50, 1
      %s52 = scalar_select %p49, %s50, %s51
      %p55 = pneg %p49
      %p56 = scmp.eq.s32.totalorder %s14, 1
      %p57 = por %p55, %p56
      %p58 = scmp.ne.s32.totalorder %s50, %s53
      %p59 = scmp.eq.s32.totalorder %s14, 0
      %p60 = por %p58, %p59
      %p61 = scmp.ne.s32.totalorder %s50, %s53
      %p62 = scmp.eq.s32.totalorder %s19, 1
      %p63 = por %p61, %p62
      %p64 = scmp.ne.s32.totalorder %s53, %s54
      %p65 = scmp.eq.s32.totalorder %s19, 0
      %p66 = por %p64, %p65
      %p67 = scmp.ne.s32.totalorder %s53, %s54
      %p68 = scmp.eq.s32.totalorder %s20, 1
      %p69 = por %p67, %p68
      %p71 = scmp.ne.s32.totalorder %s54, %s70
      %p72 = scmp.eq.s32.totalorder %s20, 0
      %p73 = por %p71, %p72
      %s74 = ssub.s32 %s14, %s21
      %p75 = scmp.eq.s32.totalorder %s74, 0
      %s77 = sadd.s32 %s76, 1
      %s78 = scalar_select %p75, %s76, %s77
      %p81 = pneg %p75
      %p82 = scmp.eq.s32.totalorder %s14, 1
      %p83 = por %p81, %p82
      %p84 = scmp.ne.s32.totalorder %s76, %s79
      %p85 = scmp.eq.s32.totalorder %s14, 0
      %p86 = por %p84, %p85
      %p87 = scmp.ne.s32.totalorder %s76, %s79
      %p88 = scmp.eq.s32.totalorder %s19, 1
      %p89 = por %p87, %p88
      %p90 = scmp.ne.s32.totalorder %s79, %s80
      %p91 = scmp.eq.s32.totalorder %s19, 0
      %p92 = por %p90, %p91
      %p93 = scmp.ne.s32.totalorder %s79, %s80
      %p94 = scmp.eq.s32.totalorder %s20, 1
      %p95 = por %p93, %p94
      %p97 = scmp.ne.s32.totalorder %s80, %s96
      %p98 = scmp.eq.s32.totalorder %s20, 0
      %p99 = por %p97, %p98
      %p100 = scmp.le.s32.totalorder 1, %s14
      %p101 = scmp.lt.s32.totalorder %s14, 3
      %p102 = pnand %p100, %p101
      %p103 = pneg %p102
      // Predicated region
      $region9: #{tpu_custom_call.1} parent=5 // pred_check
        _
      $region10: #{tpu_custom_call.1} parent=5 // pred_check_branch
        %105 = sbr.rel (%p102) target = $region12
      $region11: #{tpu_custom_call.1} parent=5 // pred_region
        %s106 = ssub.s32 %s14, 1
      $region12: #{tpu_custom_call.1} parent=5 // pred_fallthru
        _
      %p107 = scmp.lt.s32.totalorder %s14, 2
      // Predicated region
      $region13: #{tpu_custom_call.1} parent=5 // pred_check
        %p108 = pneg %p107
      $region14: #{tpu_custom_call.1} parent=5 // pred_check_branch
        %110 = sbr.rel (%p108) target = $region16
      $region15: #{tpu_custom_call.1} parent=5 // pred_region
        // Predicated region
        $region17: #{tpu_custom_call.1} parent=15 // pred_check
          %p111 = pneg %p34
        $region18: #{tpu_custom_call.1} parent=15 // pred_check_branch
          %113 = sbr.rel (%p111) target = $region20
        $region19: #{tpu_custom_call.1} parent=15 // pred_region
          %s114 = sand.u32 %s24, 1
          %s115 = scalar_lea.sflag [#allocation3], %s114
          %s116 = sand.u32 %s24, 1
          %s117 = smul.addr %s116, 32
          %s118 = scalar_lea.vmem [#allocation2], %s117
          %s119 = smul.u32 2, %s14
          %s121 = ssub.s32 512, 512
          %122 = vsyncadd %s115, %s121
          %s123 = smul.addr %s119, 2
          %s124 = smul.addr %s123, 128
          %s125 = scalar_lea.hbm %s0, %s124
          %s126 = sshll.u32 %s118, 4
          %s127 = int_to_ptr.vmem [resolvable:$true] %s126
          %132 = dma.hbm_to_vmem [thread:$0]  %s125, 512, %s127, %s115, 256, 256, 16
        $region20: #{tpu_custom_call.1} parent=15 // pred_fallthru
          _
        // Predicated region
        $region21: #{tpu_custom_call.1} parent=15 // pred_check
          %p133 = pneg %p60
        $region22: #{tpu_custom_call.1} parent=15 // pred_check_branch
          %135 = sbr.rel (%p133) target = $region24
        $region23: #{tpu_custom_call.1} parent=15 // pred_region
          %s136 = sand.u32 %s50, 1
          %s137 = scalar_lea.sflag [#allocation5], %s136
          %s138 = sand.u32 %s50, 1
          %s139 = smul.addr %s138, 32
          %s140 = scalar_lea.vmem [#allocation4], %s139
          %s141 = smul.u32 2, %s14
          %s143 = ssub.s32 512, 512
          %144 = vsyncadd %s137, %s143
          %s145 = smul.addr %s141, 2
          %s146 = smul.addr %s145, 128
          %s147 = scalar_lea.hbm %s1, %s146
          %s148 = sshll.u32 %s140, 4
          %s149 = int_to_ptr.vmem [resolvable:$true] %s148
          %154 = dma.hbm_to_vmem [thread:$0]  %s147, 512, %s149, %s137, 256, 256, 16
        $region24: #{tpu_custom_call.1} parent=15 // pred_fallthru
          _
      $region16: #{tpu_custom_call.1} parent=5 // pred_fallthru
        _
      %p155 = scmp.le.s32.totalorder 1, %s14
      %p156 = scmp.lt.s32.totalorder %s14, 3
      %p157 = pnand %p155, %p156
      %p158 = pneg %p157
      // Predicated region
      $region25: #{tpu_custom_call.1} parent=5 // pred_check
        _
      $region26: #{tpu_custom_call.1} parent=5 // pred_check_branch
        %160 = sbr.rel (%p157) target = $region28
      $region27: #{tpu_custom_call.1} parent=5 // pred_region
        %s161 = ssub.s32 %s14, 1
        %s162 = sand.u32 %s27, 1
        %s163 = scalar_lea.sflag [#allocation3], %s162
        %s164 = sand.u32 %s27, 1
        %s165 = smul.addr %s164, 32
        %s166 = scalar_lea.vmem [#allocation2], %s165
        // Predicated region
        $region29: #{tpu_custom_call.1} parent=27 // pred_check
          %p167 = pneg %p40
        $region30: #{tpu_custom_call.1} parent=27 // pred_check_branch
          %169 = sbr.rel (%p167) target = $region32
        $region31: #{tpu_custom_call.1} parent=27 // pred_region
          %170 = dma.done %s163, 512
        $region32: #{tpu_custom_call.1} parent=27 // pred_fallthru
          _
        %s171 = sand.u32 %s53, 1
        %s172 = scalar_lea.sflag [#allocation5], %s171
        %s173 = sand.u32 %s53, 1
        %s174 = smul.addr %s173, 32
        %s175 = scalar_lea.vmem [#allocation4], %s174
        // Predicated region
        $region33: #{tpu_custom_call.1} parent=27 // pred_check
          %p176 = pneg %p66
        $region34: #{tpu_custom_call.1} parent=27 // pred_check_branch
          %178 = sbr.rel (%p176) target = $region36
        $region35: #{tpu_custom_call.1} parent=27 // pred_region
          %179 = dma.done %s172, 512
        $region36: #{tpu_custom_call.1} parent=27 // pred_fallthru
          _
        %s180 = sand.u32 %s27, 1
        %s181 = scalar_lea.sflag [#allocation3], %s180
        %s182 = sand.u32 %s27, 1
        %s183 = smul.addr %s182, 32
        %s184 = scalar_lea.vmem [#allocation2], %s183
        %p185 = pneg %p40
        %p186 = pneg %p37
        %s187 = sand.u32 %s53, 1
        %s188 = scalar_lea.sflag [#allocation5], %s187
        %s189 = sand.u32 %s53, 1
        %s190 = smul.addr %s189, 32
        %s191 = scalar_lea.vmem [#allocation4], %s190
        %p192 = pneg %p66
        %p193 = pneg %p63
        %p194 = pneg %p92
        %p195 = pneg %p89
        %s196 = smul.u32 2, %s19
        %p197 = scmp.lt.s32.totalorder %s196, 3
        %s198 = scalar_select %p197, %s196, 3
        %s199 = smul.addr %s198, 8
        %s200 = scalar_lea.vmem %s2, %s199
        %s201 = smul.u32 2, %s19
        %s202 = smul.u32 2, %s19
        %s203 = smul.u32 2, %s19
        %p204 = scmp.lt.s32.totalorder %s203, 3
        %s205 = scalar_select %p204, %s203, 3
        %s206 = smul.addr %s205, 8
        %s207 = scalar_lea.vmem %s2, %s206
        %s208 = smul.u32 2, %s19
        %v209 = vld [vmem:[%s166] sm:$0xff]
        %v210 = vld [vmem:[%s166 + $0x8] sm:$0xff]
        %v211 = vld [vmem:[%s166 + $0x10] sm:$0xff]
        %v212 = vld [vmem:[%s166 + $0x18] sm:$0xff]
        %v213 = vld [vmem:[%s175] sm:$0xff]
        %v214 = vld [vmem:[%s175 + $0x8] sm:$0xff]
        %v215 = vld [vmem:[%s175 + $0x10] sm:$0xff]
        %v216 = vld [vmem:[%s175 + $0x18] sm:$0xff]
        %v217 = vand.u32 2147483647, %v209
        %v218 = vand.u32 2147483647, %v210
        %v219 = vand.u32 2147483647, %v211
        %v220 = vand.u32 2147483647, %v212
        %v221 = vsub.f32 0.0, %v217
        %v222 = vsub.f32 0.0, %v218
        %v223 = vsub.f32 0.0, %v219
        %v224 = vsub.f32 0.0, %v220
        %v225 = vmul.f32 %v221, 1.442695
        %v226 = vpow.pop %v225
        %v227 = vmul.f32 %v222, 1.442695
        %v228 = vpow.pop %v227
        %v229 = vmul.f32 %v223, 1.442695
        %v230 = vpow.pop %v229
        %v231 = vmul.f32 %v224, 1.442695
        %v232 = vpow.pop %v231
        %v233 = vadd.f32 %v226, 1.0
        %v234 = vadd.f32 %v228, 1.0
        %v235 = vadd.f32 %v230, 1.0
        %v236 = vadd.f32 %v232, 1.0
        %v237 = vlog2.pop %v233
        %v238 = vmul.f32 %v237, 0.6931472
        %v239 = vlog2.pop %v234
        %v240 = vmul.f32 %v239, 0.6931472
        %v241 = vlog2.pop %v235
        %v242 = vmul.f32 %v241, 0.6931472
        %v243 = vlog2.pop %v236
        %v244 = vmul.f32 %v243, 0.6931472
        %v245 = vmin.f32 %v209, 0.0
        %v246 = vmin.f32 %v210, 0.0
        %v247 = vmin.f32 %v211, 0.0
        %v248 = vmin.f32 %v212, 0.0
        %v249 = vsub.f32 %v245, %v238
        %v250 = vsub.f32 %v246, %v240
        %v251 = vsub.f32 %v247, %v242
        %v252 = vsub.f32 %v248, %v244
        %v253 = vmax.f32 %v249, -18.420681
        %v254 = vmax.f32 %v250, -18.420681
        %v255 = vmax.f32 %v251, -18.420681
        %v256 = vmax.f32 %v252, -18.420681
        %v257 = vmax.f32 %v209, 0.0
        %v258 = vmax.f32 %v210, 0.0
        %v259 = vmax.f32 %v211, 0.0
        %v260 = vmax.f32 %v212, 0.0
        %v261 = vsub.f32 0.0, %v257
        %v262 = vsub.f32 0.0, %v258
        %v263 = vsub.f32 0.0, %v259
        %v264 = vsub.f32 0.0, %v260
        %v265 = vsub.f32 %v261, %v238
        %v266 = vsub.f32 %v262, %v240
        %v267 = vsub.f32 %v263, %v242
        %v268 = vsub.f32 %v264, %v244
        %v269 = vmax.f32 %v265, -18.420681
        %v270 = vmax.f32 %v266, -18.420681
        %v271 = vmax.f32 %v267, -18.420681
        %v272 = vmax.f32 %v268, -18.420681
        %v273 = vsub.f32 %v253, %v269
        %v274 = vsub.f32 %v254, %v270
        %v275 = vsub.f32 %v255, %v271
        %v276 = vsub.f32 %v256, %v272
        %v277 = vmul.f32 %v213, %v273
        %v278 = vmul.f32 %v214, %v274
        %v279 = vmul.f32 %v215, %v275
        %v280 = vmul.f32 %v216, %v276
        %v281 = vadd.f32 %v269, %v277
        %v282 = vadd.f32 %v270, %v278
        %v283 = vadd.f32 %v271, %v279
        %v284 = vadd.f32 %v272, %v280
        %v285 = vrcp.pop %v233
        %v286 = vmul.f32 1.0, %v285
        %v287 = vrcp.pop %v234
        %v288 = vmul.f32 1.0, %v287
        %v289 = vrcp.pop %v235
        %v290 = vmul.f32 1.0, %v289
        %v291 = vrcp.pop %v236
        %v292 = vmul.f32 1.0, %v291
        %vm293 = vcmp.ge.f32.partialorder %v209, 0.0
        %vm294 = vcmp.ge.f32.partialorder %v210, 0.0
        %vm295 = vcmp.ge.f32.partialorder %v211, 0.0
        %vm296 = vcmp.ge.f32.partialorder %v212, 0.0
        %v297 = vmul.f32 %v226, %v286
        %v298 = vmul.f32 %v228, %v288
        %v299 = vmul.f32 %v230, %v290
        %v300 = vmul.f32 %v232, %v292
        %v301 = vsel %vm293, %v286, %v297
        %v302 = vsel %vm294, %v288, %v298
        %v303 = vsel %vm295, %v290, %v299
        %v304 = vsel %vm296, %v292, %v300
        %v305 = vsub.f32 1.0, %v301
        %v306 = vsub.f32 1.0, %v302
        %v307 = vsub.f32 1.0, %v303
        %v308 = vsub.f32 1.0, %v304
        %vm309 = vcmp.gt.f32.partialorder %v213, 0.5
        %vm310 = vcmp.gt.f32.partialorder %v214, 0.5
        %vm311 = vcmp.gt.f32.partialorder %v215, 0.5
        %vm312 = vcmp.gt.f32.partialorder %v216, 0.5
        %v313 = vmul.f32 %v301, %v301
        %v314 = vmul.f32 %v302, %v302
        %v315 = vmul.f32 %v303, %v303
        %v316 = vmul.f32 %v304, %v304
        %v317 = vmul.f32 %v313, %v313
        %v318 = vmul.f32 %v314, %v314
        %v319 = vmul.f32 %v315, %v315
        %v320 = vmul.f32 %v316, %v316
        %v321 = vsel %vm309, %v305, %v317
        %v322 = vsel %vm310, %v306, %v318
        %v323 = vsel %vm311, %v307, %v319
        %v324 = vsel %vm312, %v308, %v320
        %v325 = vmul.f32 %v281, %v321
        %v326 = vmul.f32 %v282, %v322
        %v327 = vmul.f32 %v283, %v323
        %v328 = vmul.f32 %v284, %v324
        %v329 = vadd.f32 %v213, %v214
        %330 = vadd.xlane.f32.xlu0 %v329
        %v331 = vpop.xlane.xlu0 %330
        %v332 = vadd.f32 %v215, %v216
        %333 = vadd.xlane.f32.xlu0 %v332
        %v334 = vpop.xlane.xlu0 %333
        %v335 = vmul.f32 %v213, %v325
        %v336 = vmul.f32 %v214, %v326
        %v337 = vmul.f32 %v215, %v327
        %v338 = vmul.f32 %v216, %v328
        %v339 = vadd.f32 %v335, %v336
        %340 = vadd.xlane.f32.xlu0 %v339
        %v341 = vpop.xlane.xlu0 %340
        %v342 = vadd.f32 %v337, %v338
        %343 = vadd.xlane.f32.xlu0 %v342
        %v344 = vpop.xlane.xlu0 %343
        %v345 = vadd.f32 %v325, %v326
        %346 = vadd.xlane.f32.xlu0 %v345
        %v347 = vpop.xlane.xlu0 %346
        %v348 = vadd.f32 %v327, %v328
        %349 = vadd.xlane.f32.xlu0 %v348
        %v350 = vpop.xlane.xlu0 %349
        %v351 = vsub.f32 %v347, %v341
        %v352 = vsub.f32 %v350, %v344
        %v353 = vsub.f32 256.0, %v331
        %v354 = vsub.f32 256.0, %v334
        %v355 = vadd.f32 %v331, 1e-08
        %v356 = vadd.f32 %v334, 1e-08
        %v357 = vrcp.pop %v355
        %v358 = vmul.f32 %v341, %v357
        %v359 = vrcp.pop %v356
        %v360 = vmul.f32 %v344, %v359
        %v361 = vadd.f32 %v353, 1e-08
        %v362 = vadd.f32 %v354, 1e-08
        %v363 = vrcp.pop %v361
        %v364 = vmul.f32 %v351, %v363
        %v365 = vrcp.pop %v362
        %v366 = vmul.f32 %v352, %v365
        %v367 = vadd.f32 %v358, %v364
        %v368 = vadd.f32 %v360, %v366
        %vm369 = vcmask 7168
        %370 = vst.msk [vmem:[%s207] sm:$0xff] %vm369, %v367
        %371 = vst.msk [vmem:[%s207 + $0x8] sm:$0xff] %vm369, %v368
        %s372 = smul.u32 2, %s19
        %p373 = scmp.lt.s32.totalorder %s372, 3
        %s374 = scalar_select %p373, %s372, 3
        %s375 = smul.addr %s374, 8
        %s376 = scalar_lea.vmem %s2, %s375
        // Predicated region
        $region37: #{tpu_custom_call.1} parent=27 // pred_check
          %p377 = pneg %p89
        $region38: #{tpu_custom_call.1} parent=27 // pred_check_branch
          %379 = sbr.rel (%p377) target = $region40
        $region39: #{tpu_custom_call.1} parent=27 // pred_region
          %s380 = smul.u32 2, %s19
        $region40: #{tpu_custom_call.1} parent=27 // pred_fallthru
          _
      $region28: #{tpu_custom_call.1} parent=5 // pred_fallthru
        _
      %p381 = scmp.le.s32.totalorder 2, %s14
      // Predicated region
      $region41: #{tpu_custom_call.1} parent=5 // pred_check
        %p382 = pneg %p381
      $region42: #{tpu_custom_call.1} parent=5 // pred_check_branch
        %384 = sbr.rel (%p382) target = $region44
      $region43: #{tpu_custom_call.1} parent=5 // pred_region
        %s385 = ssub.s32 %s14, 2
        // Predicated region
        $region45: #{tpu_custom_call.1} parent=43 // pred_check
          %p386 = pneg %p95
        $region46: #{tpu_custom_call.1} parent=43 // pred_check_branch
          %388 = sbr.rel (%p386) target = $region48
        $region47: #{tpu_custom_call.1} parent=43 // pred_region
          %s389 = smul.u32 2, %s20
          %p390 = scmp.lt.s32.totalorder %s389, 3
          %s391 = scalar_select %p390, %s389, 3
          %s392 = smul.addr %s391, 8
          %s393 = scalar_lea.vmem %s2, %s392
        $region48: #{tpu_custom_call.1} parent=43 // pred_fallthru
          _
      $region44: #{tpu_custom_call.1} parent=5 // pred_fallthru
        _
    $region6: #{tpu_custom_call.1} parent=1 // loop_footer
      %s18 = sadd.s32 1, %s14
    $region7: #{tpu_custom_call.1} parent=1 // loop_footer_branch
      %13 = sbr.rel target = $region3
    $region8: #{tpu_custom_call.1} parent=1 // loop_exit
      _
    %394 = vsyncpa [#allocation3], 1
    %s395 = scalar_lea.sflag [#allocation3], 1
    %396 = vsyncpa %s395, 1
    %397 = vsyncpa [#allocation5], 1
    %s398 = scalar_lea.sflag [#allocation5], 1
    %399 = vsyncpa %s398, 1

</llo_original>
